<compile_context>
chip_gen: v7x
topology: tpu7x:2x2x1
jax: 0.10.0
libtpu: 0.0.40
codegen_flags: <defaults>
</compile_context>

<pallas_src>
import functools

import numpy as np
import jax
import jax.numpy as jnp
from jax.experimental import pallas as pl
from jax.experimental.pallas import tpu as pltpu


def _round_up(x, m):
    return (x + m - 1) // m * m


# ----------------------------------------------------------------------------
# Fused kernel: stacked-LSTM single step (t=0, h=c=0) + block-diag class head.
# ----------------------------------------------------------------------------
def _decoder_kernel(x_ref, w_ref, o_ref, *, layer_dims, bias_row, out_w, h2):
    """x_ref : (T, B, E)    full input; only x_ref[0] is read (t == 0)
       w_ref : (n_lstm + 1, ROWS, 128) packed weights
               slab l < n_lstm : rows 0:in_l  -> W_ih^T for gates [i|g|o]
                                 row bias_row -> (b_ih + b_hh) for [i|g|o]
               slab n_lstm     : rows 0:H2    -> block-diag classification W
                                 row bias_row -> tiled classification bias
       o_ref : (B, target_size * num_classes)
    """
    h = x_ref[0]                                         # (B, E), h0 = c0 = 0
    n_lstm = len(layer_dims)

    # Stacked LSTM layers, single step with h = c = 0:
    #   gates = x @ W_ih^T + (b_ih + b_hh)   (h @ W_hh^T is exactly 0)
    #   c_new = i * g                        (f * c is exactly 0 -> f dropped)
    #   h_new = o * tanh(c_new)
    for l, (in_l, hid) in enumerate(layer_dims):
        slab = w_ref[l]                                  # (ROWS, 128)
        gates = (jnp.dot(h, slab[:in_l, :],
                         preferred_element_type=jnp.float32)
                 + slab[bias_row:bias_row + 1, :])       # (B, 128)
        i_g = jax.nn.sigmoid(gates[:, 0 * hid:1 * hid])
        g_g = jnp.tanh(gates[:, 1 * hid:2 * hid])
        o_g = jax.nn.sigmoid(gates[:, 2 * hid:3 * hid])
        h = o_g * jnp.tanh(i_g * g_g)                    # (B, hid)

    # Classification head: one matmul against the block-diagonal weight,
    # one store of the whole (B, target_size * C) slab.
    slab = w_ref[n_lstm]
    res = (jnp.dot(h, slab[:h2, :], preferred_element_type=jnp.float32)
           + slab[bias_row:bias_row + 1, :])             # (B, 128)
    o_ref[...] = res[:, :out_w]


# ----------------------------------------------------------------------------
# Host-side weight packing (one-time prep).
# ----------------------------------------------------------------------------
def prepare_decoder_weights(params, *, num_classes, target_size):
    """Pack every weight into ONE zero-padded f32 buffer (see kernel docstring).
    W_hh is provably unused (only t=0 with h=c=0 is ever read), and the forget
    gate columns are dropped (f * c0 == 0)."""
    layer_params = list(params["rnn1"]) + list(params["rnn2"])
    n_lstm = len(layer_params)

    layer_dims = []
    for (w_ih, _w_hh, _b_ih, _b_hh) in layer_params:
        four_h, in_l = w_ih.shape
        layer_dims.append((int(in_l), int(four_h) // 4))

    w_cls, b_cls = params["cls"]                 # (C, seq_len), (C,)
    c, seq_len = int(w_cls.shape[0]), int(w_cls.shape[1])
    h2 = layer_dims[-1][1]
    assert c == num_classes
    assert h2 == target_size * seq_len, (
        "hidden_size must equal target_size * seq_len (got %d vs %d*%d)"
        % (h2, target_size, seq_len))
    out_w = target_size * num_classes

    in_max = max(max(in_l for in_l, _ in layer_dims), h2)
    bias_row = in_max
    rows = _round_up(in_max + 1, 8)
    lanes = _round_up(max(max(3 * h for _, h in layer_dims), out_w), 128)

    w_all = np.zeros((n_lstm + 1, rows, lanes), np.float32)
    for l, (w_ih, _w_hh, b_ih, b_hh) in enumerate(layer_params):
        in_l, hid = layer_dims[l]
        w_ih = np.asarray(w_ih, np.float32)
        b = np.asarray(b_ih, np.float32) + np.asarray(b_hh, np.float32)
        # PyTorch gate row order is [i | f | g | o]; keep [i | g | o] only.
        keep_w = np.concatenate(
            [w_ih[0:hid], w_ih[2 * hid:3 * hid], w_ih[3 * hid:4 * hid]], axis=0)
        keep_b = np.concatenate(
            [b[0:hid], b[2 * hid:3 * hid], b[3 * hid:4 * hid]])
        w_all[l, :in_l, :3 * hid] = keep_w.T
        w_all[l, bias_row, :3 * hid] = keep_b

    # Block-diagonal classification head:
    #   out[:, i*C:(i+1)*C] = h[:, i*S:(i+1)*S] @ w_cls^T + b_cls
    w_cls_np = np.asarray(w_cls, np.float32)
    b_cls_np = np.asarray(b_cls, np.float32)
    for i in range(target_size):
        w_all[n_lstm, i * seq_len:(i + 1) * seq_len,
              i * num_classes:(i + 1) * num_classes] = w_cls_np.T
    w_all[n_lstm, bias_row, :out_w] = np.tile(b_cls_np, target_size)

    meta = dict(layer_dims=tuple(layer_dims), bias_row=bias_row,
                out_w=out_w, h2=h2)
    return jnp.asarray(w_all), meta


# ----------------------------------------------------------------------------
# Forward wrapper: single pallas_call, no grid, whole arrays resident in VMEM.
# ----------------------------------------------------------------------------
def decoder_forward(prepared, x, *, num_classes, target_size):
    """x: (T, B, E) exactly as the PyTorch forward receives it.
    Returns (target_size, B, num_classes) float32, matching PyTorch."""
    w_all, meta = prepared
    _t, b, _e = x.shape
    out_w = meta["out_w"]

    kernel = functools.partial(
        _decoder_kernel, layer_dims=meta["layer_dims"],
        bias_row=meta["bias_row"], out_w=out_w, h2=meta["h2"])

    flat = pl.pallas_call(
        kernel,
        out_shape=jax.ShapeDtypeStruct((b, out_w), jnp.float32),
        in_specs=[pl.BlockSpec(memory_space=pltpu.MemorySpace.VMEM),
                  pl.BlockSpec(memory_space=pltpu.MemorySpace.VMEM)],
        out_specs=pl.BlockSpec(memory_space=pltpu.MemorySpace.VMEM),
    )(x, w_all)

    # Layout plumbing only: (B, TS*C) -> (TS, B, C).
    return jnp.transpose(flat.reshape(b, target_size, num_classes), (1, 0, 2))


# ----------------------------------------------------------------------------
# Parameter init (deterministic, PyTorch-like uniform(-1/sqrt(H), 1/sqrt(H))).
# ----------------------------------------------------------------------------
def init_decoder_params(key, num_classes, embedded_dim, num_layers, target_size):
    hidden_size = embedded_dim * 2
    seq_len = hidden_size // target_size

    def uniform(k, shape, bound):
        return jax.random.uniform(k, shape, jnp.float32, -bound, bound)

    params = {"rnn1": [], "rnn2": []}
    keys = jax.random.split(key, 8 * num_layers + 2)
    ki = 0

    h1 = embedded_dim                       # rnn1 hidden size
    for layer in range(num_layers):
        in_size = embedded_dim if layer == 0 else h1
        bnd = 1.0 / np.sqrt(h1)
        w_ih = uniform(keys[ki], (4 * h1, in_size), bnd); ki += 1
        w_hh = uniform(keys[ki], (4 * h1, h1), bnd);      ki += 1
        b_ih = uniform(keys[ki], (4 * h1,), bnd);         ki += 1
        b_hh = uniform(keys[ki], (4 * h1,), bnd);         ki += 1
        params["rnn1"].append((w_ih, w_hh, b_ih, b_hh))

    h2 = hidden_size                        # rnn2 hidden size
    for layer in range(num_layers):
        in_size = embedded_dim if layer == 0 else h2
        bnd = 1.0 / np.sqrt(h2)
        w_ih = uniform(keys[ki], (4 * h2, in_size), bnd); ki += 1
        w_hh = uniform(keys[ki], (4 * h2, h2), bnd);      ki += 1
        b_ih = uniform(keys[ki], (4 * h2,), bnd);         ki += 1
        b_hh = uniform(keys[ki], (4 * h2,), bnd);         ki += 1
        params["rnn2"].append((w_ih, w_hh, b_ih, b_hh))

    bnd = 1.0 / np.sqrt(seq_len)
    w_cls = uniform(keys[ki], (num_classes, seq_len), bnd); ki += 1
    b_cls = uniform(keys[ki], (num_classes,), bnd);         ki += 1
    params["cls"] = (w_cls, b_cls)
    return params


# ----------------------------------------------------------------------------
# Pure-JAX reference: FULL recurrence over all T steps (validates that the
# t=0-only fused kernel equals the module's forward output exactly).
# ----------------------------------------------------------------------------
def _lstm_layer_ref(x, w_ih, w_hh, b_ih, b_hh):
    _t, b, _ = x.shape
    hid = w_hh.shape[1]

    def step(carry, x_t):
        h, c = carry
        gates = x_t @ w_ih.T + b_ih + h @ w_hh.T + b_hh
        i, f, g, o = jnp.split(gates, 4, axis=-1)
        i, f, o = jax.nn.sigmoid(i), jax.nn.sigmoid(f), jax.nn.sigmoid(o)
        g = jnp.tanh(g)
        c = f * c + i * g
        h = o * jnp.tanh(c)
        return (h, c), h

    init = (jnp.zeros((b, hid), jnp.float32), jnp.zeros((b, hid), jnp.float32))
    _, ys = jax.lax.scan(step, init, x)
    return ys


def decoder_forward_ref(params, x, *, num_classes, target_size):
    y = x
    for p in params["rnn1"]:
        y = _lstm_layer_ref(y, *p)
        # TODO(synk): nn.LSTM inter-layer dropout is training-only; inference path skips it.
    for p in params["rnn2"]:
        y = _lstm_layer_ref(y, *p)
    h0 = y[0]                                  # first time step, (B, hidden)
    _b, h2 = h0.shape
    seq_len = h2 // target_size
    w_cls, b_cls = params["cls"]
    outs = []
    for i in range(target_size):
        sl = h0[:, i * seq_len:(i + 1) * seq_len]
        outs.append(sl @ w_cls.T + b_cls)
    return jnp.stack(outs, axis=0)


if __name__ == "__main__":
    # Module hyper-params (small, consistent with the forward pass):
    num_classes = 4
    embedded_dim = 16
    batch_size = 2
    num_layers = 2
    dropout = 0.0
    target_size = 4
    T = 8                                    # input sequence length
    hidden_size = embedded_dim * 2           # 32
    seq_len = hidden_size // target_size     # 8

    key = jax.random.PRNGKey(0)
    k_param, k_x = jax.random.split(key)
    params = init_decoder_params(k_param, num_classes, embedded_dim,
                                 num_layers, target_size)
    prepared = prepare_decoder_weights(params, num_classes=num_classes,
                                       target_size=target_size)

    # Input as the PyTorch forward expects it: (T, batch, embedded_dim)
    x = jax.random.normal(k_x, (T, batch_size, embedded_dim), jnp.float32)

    out = decoder_forward(prepared, x, num_classes=num_classes,
                          target_size=target_size)
    out = jax.block_until_ready(out)

    ref = decoder_forward_ref(params, x, num_classes=num_classes,
                              target_size=target_size)
    ref = jax.block_until_ready(ref)

    assert out.shape == (target_size, batch_size, num_classes), out.shape
    assert np.allclose(np.asarray(out), np.asarray(ref), atol=5e-3, rtol=5e-3), (
        "max abs diff = %g"
        % float(np.max(np.abs(np.asarray(out) - np.asarray(ref)))))

    print("KERNEL_OK")
</pallas_src>

<mosaic_0001>
module attributes {stable_mosaic.version = 11 : i64} {
  func.func @_decoder_kernel(%arg0: memref<8x2x16xf32, #tpu.memory_space<vmem>>, %arg1: memref<5x40x128xf32, #tpu.memory_space<vmem>>, %arg2: memref<2x16xf32, #tpu.memory_space<vmem>>) attributes {dimension_semantics = [], scalar_prefetch = 0 : i64, scratch_operands = 0 : i64, tpu.core_type = #tpu.core_type<tc>} {
    %c0 = arith.constant 0 : index
    %c0_0 = arith.constant 0 : index
    %c0_1 = arith.constant 0 : index
    %0 = vector.load %arg0[%c0, %c0_0, %c0_1] : memref<8x2x16xf32, #tpu.memory_space<vmem>>, vector<1x2x16xf32>
    %1 = vector.shape_cast %0 : vector<1x2x16xf32> to vector<2x16xf32>
    %c0_2 = arith.constant 0 : index
    %c0_3 = arith.constant 0 : index
    %c0_4 = arith.constant 0 : index
    %2 = vector.load %arg1[%c0_2, %c0_3, %c0_4] : memref<5x40x128xf32, #tpu.memory_space<vmem>>, vector<1x40x128xf32>
    %3 = vector.shape_cast %2 : vector<1x40x128xf32> to vector<40x128xf32>
    %4 = vector.extract_strided_slice %3 {offsets = [0, 0], sizes = [16, 128], strides = [1, 1]} : vector<40x128xf32> to vector<16x128xf32>
    %cst = arith.constant dense<0.000000e+00> : vector<2x128xf32>
    %5 = tpu.matmul %1, %4, %cst {dimension_numbers = #tpu.dot_dimension_numbers<[1], [0], [0], [1], [0, 0, 1, 1], [], []>} : vector<2x16xf32>, vector<16x128xf32>, vector<2x128xf32> -> vector<2x128xf32>
    %6 = vector.extract_strided_slice %3 {offsets = [32, 0], sizes = [1, 128], strides = [1, 1]} : vector<40x128xf32> to vector<1x128xf32>
    %7 = vector.broadcast %6 : vector<1x128xf32> to vector<2x128xf32>
    %8 = arith.addf %5, %7 : vector<2x128xf32>
    %9 = vector.extract_strided_slice %8 {offsets = [0, 0], sizes = [2, 16], strides = [1, 1]} : vector<2x128xf32> to vector<2x16xf32>
    %10 = arith.negf %9 : vector<2x16xf32>
    %11 = math.exp %10 : vector<2x16xf32>
    %cst_5 = arith.constant 1.000000e+00 : f32
    %12 = vector.broadcast %cst_5 : f32 to vector<2x16xf32>
    %13 = arith.addf %12, %11 : vector<2x16xf32>
    %14 = arith.divf %12, %13 : vector<2x16xf32>
    %15 = vector.extract_strided_slice %8 {offsets = [0, 16], sizes = [2, 16], strides = [1, 1]} : vector<2x128xf32> to vector<2x16xf32>
    %16 = math.tanh %15 : vector<2x16xf32>
    %17 = vector.extract_strided_slice %8 {offsets = [0, 32], sizes = [2, 16], strides = [1, 1]} : vector<2x128xf32> to vector<2x16xf32>
    %18 = arith.negf %17 : vector<2x16xf32>
    %19 = math.exp %18 : vector<2x16xf32>
    %cst_6 = arith.constant 1.000000e+00 : f32
    %20 = vector.broadcast %cst_6 : f32 to vector<2x16xf32>
    %21 = arith.addf %20, %19 : vector<2x16xf32>
    %22 = arith.divf %20, %21 : vector<2x16xf32>
    %23 = arith.mulf %14, %16 : vector<2x16xf32>
    %24 = math.tanh %23 : vector<2x16xf32>
    %25 = arith.mulf %22, %24 : vector<2x16xf32>
    %c1 = arith.constant 1 : index
    %c0_7 = arith.constant 0 : index
    %c0_8 = arith.constant 0 : index
    %26 = vector.load %arg1[%c1, %c0_7, %c0_8] : memref<5x40x128xf32, #tpu.memory_space<vmem>>, vector<1x40x128xf32>
    %27 = vector.shape_cast %26 : vector<1x40x128xf32> to vector<40x128xf32>
    %28 = vector.extract_strided_slice %27 {offsets = [0, 0], sizes = [16, 128], strides = [1, 1]} : vector<40x128xf32> to vector<16x128xf32>
    %cst_9 = arith.constant dense<0.000000e+00> : vector<2x128xf32>
    %29 = tpu.matmul %25, %28, %cst_9 {dimension_numbers = #tpu.dot_dimension_numbers<[1], [0], [0], [1], [0, 0, 1, 1], [], []>} : vector<2x16xf32>, vector<16x128xf32>, vector<2x128xf32> -> vector<2x128xf32>
    %30 = vector.extract_strided_slice %27 {offsets = [32, 0], sizes = [1, 128], strides = [1, 1]} : vector<40x128xf32> to vector<1x128xf32>
    %31 = vector.broadcast %30 : vector<1x128xf32> to vector<2x128xf32>
    %32 = arith.addf %29, %31 : vector<2x128xf32>
    %33 = vector.extract_strided_slice %32 {offsets = [0, 0], sizes = [2, 16], strides = [1, 1]} : vector<2x128xf32> to vector<2x16xf32>
    %34 = arith.negf %33 : vector<2x16xf32>
    %35 = math.exp %34 : vector<2x16xf32>
    %cst_10 = arith.constant 1.000000e+00 : f32
    %36 = vector.broadcast %cst_10 : f32 to vector<2x16xf32>
    %37 = arith.addf %36, %35 : vector<2x16xf32>
    %38 = arith.divf %36, %37 : vector<2x16xf32>
    %39 = vector.extract_strided_slice %32 {offsets = [0, 16], sizes = [2, 16], strides = [1, 1]} : vector<2x128xf32> to vector<2x16xf32>
    %40 = math.tanh %39 : vector<2x16xf32>
    %41 = vector.extract_strided_slice %32 {offsets = [0, 32], sizes = [2, 16], strides = [1, 1]} : vector<2x128xf32> to vector<2x16xf32>
    %42 = arith.negf %41 : vector<2x16xf32>
    %43 = math.exp %42 : vector<2x16xf32>
    %cst_11 = arith.constant 1.000000e+00 : f32
    %44 = vector.broadcast %cst_11 : f32 to vector<2x16xf32>
    %45 = arith.addf %44, %43 : vector<2x16xf32>
    %46 = arith.divf %44, %45 : vector<2x16xf32>
    %47 = arith.mulf %38, %40 : vector<2x16xf32>
    %48 = math.tanh %47 : vector<2x16xf32>
    %49 = arith.mulf %46, %48 : vector<2x16xf32>
    %c2 = arith.constant 2 : index
    %c0_12 = arith.constant 0 : index
    %c0_13 = arith.constant 0 : index
    %50 = vector.load %arg1[%c2, %c0_12, %c0_13] : memref<5x40x128xf32, #tpu.memory_space<vmem>>, vector<1x40x128xf32>
    %51 = vector.shape_cast %50 : vector<1x40x128xf32> to vector<40x128xf32>
    %52 = vector.extract_strided_slice %51 {offsets = [0, 0], sizes = [16, 128], strides = [1, 1]} : vector<40x128xf32> to vector<16x128xf32>
    %cst_14 = arith.constant dense<0.000000e+00> : vector<2x128xf32>
    %53 = tpu.matmul %49, %52, %cst_14 {dimension_numbers = #tpu.dot_dimension_numbers<[1], [0], [0], [1], [0, 0, 1, 1], [], []>} : vector<2x16xf32>, vector<16x128xf32>, vector<2x128xf32> -> vector<2x128xf32>
    %54 = vector.extract_strided_slice %51 {offsets = [32, 0], sizes = [1, 128], strides = [1, 1]} : vector<40x128xf32> to vector<1x128xf32>
    %55 = vector.broadcast %54 : vector<1x128xf32> to vector<2x128xf32>
    %56 = arith.addf %53, %55 : vector<2x128xf32>
    %57 = vector.extract_strided_slice %56 {offsets = [0, 0], sizes = [2, 32], strides = [1, 1]} : vector<2x128xf32> to vector<2x32xf32>
    %58 = arith.negf %57 : vector<2x32xf32>
    %59 = math.exp %58 : vector<2x32xf32>
    %cst_15 = arith.constant 1.000000e+00 : f32
    %60 = vector.broadcast %cst_15 : f32 to vector<2x32xf32>
    %61 = arith.addf %60, %59 : vector<2x32xf32>
    %62 = arith.divf %60, %61 : vector<2x32xf32>
    %63 = vector.extract_strided_slice %56 {offsets = [0, 32], sizes = [2, 32], strides = [1, 1]} : vector<2x128xf32> to vector<2x32xf32>
    %64 = math.tanh %63 : vector<2x32xf32>
    %65 = vector.extract_strided_slice %56 {offsets = [0, 64], sizes = [2, 32], strides = [1, 1]} : vector<2x128xf32> to vector<2x32xf32>
    %66 = arith.negf %65 : vector<2x32xf32>
    %67 = math.exp %66 : vector<2x32xf32>
    %cst_16 = arith.constant 1.000000e+00 : f32
    %68 = vector.broadcast %cst_16 : f32 to vector<2x32xf32>
    %69 = arith.addf %68, %67 : vector<2x32xf32>
    %70 = arith.divf %68, %69 : vector<2x32xf32>
    %71 = arith.mulf %62, %64 : vector<2x32xf32>
    %72 = math.tanh %71 : vector<2x32xf32>
    %73 = arith.mulf %70, %72 : vector<2x32xf32>
    %c3 = arith.constant 3 : index
    %c0_17 = arith.constant 0 : index
    %c0_18 = arith.constant 0 : index
    %74 = vector.load %arg1[%c3, %c0_17, %c0_18] : memref<5x40x128xf32, #tpu.memory_space<vmem>>, vector<1x40x128xf32>
    %75 = vector.shape_cast %74 : vector<1x40x128xf32> to vector<40x128xf32>
    %76 = vector.extract_strided_slice %75 {offsets = [0, 0], sizes = [32, 128], strides = [1, 1]} : vector<40x128xf32> to vector<32x128xf32>
    %cst_19 = arith.constant dense<0.000000e+00> : vector<2x128xf32>
    %77 = tpu.matmul %73, %76, %cst_19 {dimension_numbers = #tpu.dot_dimension_numbers<[1], [0], [0], [1], [0, 0, 1, 1], [], []>} : vector<2x32xf32>, vector<32x128xf32>, vector<2x128xf32> -> vector<2x128xf32>
    %78 = vector.extract_strided_slice %75 {offsets = [32, 0], sizes = [1, 128], strides = [1, 1]} : vector<40x128xf32> to vector<1x128xf32>
    %79 = vector.broadcast %78 : vector<1x128xf32> to vector<2x128xf32>
    %80 = arith.addf %77, %79 : vector<2x128xf32>
    %81 = vector.extract_strided_slice %80 {offsets = [0, 0], sizes = [2, 32], strides = [1, 1]} : vector<2x128xf32> to vector<2x32xf32>
    %82 = arith.negf %81 : vector<2x32xf32>
    %83 = math.exp %82 : vector<2x32xf32>
    %cst_20 = arith.constant 1.000000e+00 : f32
    %84 = vector.broadcast %cst_20 : f32 to vector<2x32xf32>
    %85 = arith.addf %84, %83 : vector<2x32xf32>
    %86 = arith.divf %84, %85 : vector<2x32xf32>
    %87 = vector.extract_strided_slice %80 {offsets = [0, 32], sizes = [2, 32], strides = [1, 1]} : vector<2x128xf32> to vector<2x32xf32>
    %88 = math.tanh %87 : vector<2x32xf32>
    %89 = vector.extract_strided_slice %80 {offsets = [0, 64], sizes = [2, 32], strides = [1, 1]} : vector<2x128xf32> to vector<2x32xf32>
    %90 = arith.negf %89 : vector<2x32xf32>
    %91 = math.exp %90 : vector<2x32xf32>
    %cst_21 = arith.constant 1.000000e+00 : f32
    %92 = vector.broadcast %cst_21 : f32 to vector<2x32xf32>
    %93 = arith.addf %92, %91 : vector<2x32xf32>
    %94 = arith.divf %92, %93 : vector<2x32xf32>
    %95 = arith.mulf %86, %88 : vector<2x32xf32>
    %96 = math.tanh %95 : vector<2x32xf32>
    %97 = arith.mulf %94, %96 : vector<2x32xf32>
    %c4 = arith.constant 4 : index
    %c0_22 = arith.constant 0 : index
    %c0_23 = arith.constant 0 : index
    %98 = vector.load %arg1[%c4, %c0_22, %c0_23] : memref<5x40x128xf32, #tpu.memory_space<vmem>>, vector<1x40x128xf32>
    %99 = vector.shape_cast %98 : vector<1x40x128xf32> to vector<40x128xf32>
    %100 = vector.extract_strided_slice %99 {offsets = [0, 0], sizes = [32, 128], strides = [1, 1]} : vector<40x128xf32> to vector<32x128xf32>
    %cst_24 = arith.constant dense<0.000000e+00> : vector<2x128xf32>
    %101 = tpu.matmul %97, %100, %cst_24 {dimension_numbers = #tpu.dot_dimension_numbers<[1], [0], [0], [1], [0, 0, 1, 1], [], []>} : vector<2x32xf32>, vector<32x128xf32>, vector<2x128xf32> -> vector<2x128xf32>
    %102 = vector.extract_strided_slice %99 {offsets = [32, 0], sizes = [1, 128], strides = [1, 1]} : vector<40x128xf32> to vector<1x128xf32>
    %103 = vector.broadcast %102 : vector<1x128xf32> to vector<2x128xf32>
    %104 = arith.addf %101, %103 : vector<2x128xf32>
    %105 = vector.extract_strided_slice %104 {offsets = [0, 0], sizes = [2, 16], strides = [1, 1]} : vector<2x128xf32> to vector<2x16xf32>
    %c0_25 = arith.constant 0 : index
    %c0_26 = arith.constant 0 : index
    %106 = vector.load %arg2[%c0_25, %c0_26] : memref<2x16xf32, #tpu.memory_space<vmem>>, vector<2x16xf32>
    tpu.vector_store %arg2[%c0_25, %c0_26], %105 {strides = array<i32>} : memref<2x16xf32, #tpu.memory_space<vmem>>, vector<2x16xf32>,
    return
  }
}

</mosaic_0001>

<llo_original>
// kernel: tpu_custom_call.1
$region0: #{tpu_custom_call.1}
  #allocation0 [shape = 'u32[]', space=smem, size = 0x4, offset = 0x4, fixed_abs, tag = 'smem constant byte address 0x4 - core index']
  #allocation1 [shape = 'u32[144,128]{1,0:T(1,128)}', space=vmem, size = 0x12000, scoped, tag = 'internal scratch']
  %s0 = inlined_call_operand.hbm [shape: f32[8,2,16], index: 0, kind: input, shape index: {}]
  %s1 = inlined_call_operand.hbm [shape: f32[5,40,128], index: 1, kind: input, shape index: {}]
  %s2 = inlined_call_operand.hbm [shape: f32[2,16], index: 2, kind: output, shape index: {}]
  %s3 = sld [smem:[#allocation0]]
  $region26: #{tpu_custom_call.1} parent=0
    _
  %s5 = ssub.s32 1, %s3
  %s6 = scalar_select 0, %s5, %s3
  $region1: #{tpu_custom_call.1} parent=0
    #allocation2 [shape = 'u8[8192]{0}', space=vmem, size = 0x2000, scoped, tag = 'input window, operand 0, single buffered']
    #allocation3 [shape = 's32[1]{0}', space=sflag, size = 0x4, scoped, tag = 'scoped memory for tpu_custom_call.1']
    #allocation4 [shape = 's32[1]{0}', space=sflag, size = 0x4, scoped, tag = 'scoped memory for tpu_custom_call.1']
    #allocation5 [shape = 'u8[102400]{0}', space=vmem, size = 0x19000, scoped, tag = 'input window, operand 1, single buffered']
    #allocation6 [shape = 's32[1]{0}', space=sflag, size = 0x4, scoped, tag = 'scoped memory for tpu_custom_call.1']
    #allocation7 [shape = 'u8[1024]{0}', space=vmem, size = 0x400, scoped, tag = 'output window, operand 0, single buffered']
    %7 = vsyncpa [#allocation3], 0
    %8 = vsyncpa [#allocation6], 0
    %9 = vsyncpa [#allocation4], 0
    // Predicated region
    $region2: #{tpu_custom_call.1} parent=1 // pred_check
      _
    $region3: #{tpu_custom_call.1} parent=1 // pred_check_branch
      %11 = sbr.rel (0) target = $region5
    $region4: #{tpu_custom_call.1} parent=1 // pred_region
      %s13 = ssub.s32 256, 256
      %14 = vsyncadd [#allocation3], %s13
      %s15 = sshll.u32 [#allocation2], 4
      %s16 = int_to_ptr.vmem [resolvable:$true] %s15
      %21 = dma.hbm_to_vmem [thread:$0]  %s0, 256, %s16, [#allocation3], 32, 32, 2
    $region5: #{tpu_custom_call.1} parent=1 // pred_fallthru
      _
    // Predicated region
    $region6: #{tpu_custom_call.1} parent=1 // pred_check
      _
    $region7: #{tpu_custom_call.1} parent=1 // pred_check_branch
      %23 = sbr.rel (0) target = $region9
    $region8: #{tpu_custom_call.1} parent=1 // pred_region
      %s25 = ssub.s32 3200, 3200
      %26 = vsyncadd [#allocation6], %s25
      %s27 = sshll.u32 [#allocation5], 4
      %s28 = int_to_ptr.vmem [resolvable:$true] %s27
      %33 = dma.hbm_to_vmem [thread:$0]  %s1, 3200, %s28, [#allocation6], 128, 128, 8
    $region9: #{tpu_custom_call.1} parent=1 // pred_fallthru
      _
    // Predicated region
    $region10: #{tpu_custom_call.1} parent=1 // pred_check
      _
    $region11: #{tpu_custom_call.1} parent=1 // pred_check_branch
      %35 = sbr.rel (0) target = $region13
    $region12: #{tpu_custom_call.1} parent=1 // pred_region
      %36 = dma.done [#allocation3], 256
    $region13: #{tpu_custom_call.1} parent=1 // pred_fallthru
      _
    // Predicated region
    $region14: #{tpu_custom_call.1} parent=1 // pred_check
      _
    $region15: #{tpu_custom_call.1} parent=1 // pred_check_branch
      %38 = sbr.rel (0) target = $region17
    $region16: #{tpu_custom_call.1} parent=1 // pred_region
      %39 = dma.done [#allocation6], 3200
    $region17: #{tpu_custom_call.1} parent=1 // pred_fallthru
      _
    %v40 = vld [vmem:[#allocation2] sm:$0x3]
    %v41 = vld [vmem:[#allocation5] sm:$0xff]
    %v42 = vld [vmem:[#allocation5 + $0x8] sm:$0xff]
    %v43 = vld [vmem:[#allocation5 + $0x20] sm:$0xff]
    %v44 = vlaneseq
    %v45 = vshrl.u32 %v44, 7
    %v46 = vsub.s32 0, %v45
    %v47 = vrot.slane %v43, %v46
    %vm48 = vcmask 130048
    %v50 = vsel %vm48, %v40, 0
    %52 = vmatprep.subr.mxu0 0.0
    %53 = vmatpush1.msra.mxu0 %v41
    %54 = vmatprep.subr.mxu0 0.0
    %55 = vmatpush1.msra.mxu0 %v42
    %56 = vmatprep.subr.mxu0 0.0
    %57 = vmatpush1.msra.mxu0 0.0
    %58 = vmatprep.subr.mxu0 0.0
    %59 = vmatpush1.msra.mxu0 0.0
    %60 = vmatprep.subr.mxu0 0.0
    %61 = vmatpush1.msra.mxu0 0.0
    %62 = vmatprep.subr.mxu0 0.0
    %63 = vmatpush1.msra.mxu0 0.0
    %64 = vmatprep.subr.mxu0 0.0
    %65 = vmatpush1.msra.mxu0 0.0
    %66 = vmatprep.subr.mxu0 0.0
    %67 = vmatpush1.msra.mxu0 0.0
    %68 = vmatprep.subr.mxu0 0.0
    %69 = vmatpush1.msra.mxu0 0.0
    %70 = vmatprep.subr.mxu0 0.0
    %71 = vmatpush1.msra.mxu0 0.0
    %72 = vmatprep.subr.mxu0 0.0
    %73 = vmatpush1.msra.mxu0 0.0
    %74 = vmatprep.subr.mxu0 0.0
    %75 = vmatpush1.msra.mxu0 0.0
    %76 = vmatprep.subr.mxu0 0.0
    %77 = vmatpush1.msra.mxu0 0.0
    %78 = vmatprep.subr.mxu0 0.0
    %79 = vmatpush1.msra.mxu0 0.0
    %80 = vmatprep.subr.mxu0 0.0
    %81 = vmatpush1.msra.mxu0 0.0
    %82 = vmatprep.subr.mxu0 0.0
    %83 = vmatpush1.msra.mxu0 0.0
    %84 = vmatprep.subr.mxu0 0.0
    %85 = vmatpush1.msra.mxu0 0.0
    %86 = vmatprep.subr.mxu0 0.0
    %87 = vmatpush1.msra.mxu0 0.0
    %88 = vmatprep.subr.mxu0 0.0
    %89 = vmatpush1.msra.mxu0 0.0
    %90 = vmatprep.subr.mxu0 0.0
    %91 = vmatpush1.msra.mxu0 0.0
    %92 = vmatprep.subr.mxu0 0.0
    %93 = vmatpush1.msra.mxu0 0.0
    %94 = vmatprep.subr.mxu0 0.0
    %95 = vmatpush1.msra.mxu0 0.0
    %96 = vmatprep.subr.mxu0 0.0
    %97 = vmatpush1.msra.mxu0 0.0
    %98 = vmatprep.subr.mxu0 0.0
    %99 = vmatpush1.msra.mxu0 0.0
    %100 = vmatprep.subr.mxu0 0.0
    %101 = vmatpush1.msra.mxu0 0.0
    %102 = vmatprep.subr.mxu0 0.0
    %103 = vmatpush1.msra.mxu0 0.0
    %104 = vmatprep.subr.mxu0 0.0
    %105 = vmatpush1.msra.mxu0 0.0
    %106 = vmatprep.subr.mxu0 0.0
    %107 = vmatpush1.msra.mxu0 0.0
    %108 = vmatprep.subr.mxu0 0.0
    %109 = vmatpush1.msra.mxu0 0.0
    %110 = vmatprep.subr.mxu0 0.0
    %111 = vmatpush1.msra.mxu0 0.0
    %112 = vmatprep.subr.mxu0 0.0
    %113 = vmatpush1.msra.mxu0 0.0
    %114 = vmatprep.subr.mxu0 0.0
    %115 = vmatpush1.msra.mxu0 0.0
    %116 = vmatprep.mubr.f32.mxu0 0.0
    %117 = vmatmul.mubr.f32.gmra.mrb[0].mxu0 %v50
    %v118 = vpop.f32.mrb[0].mxu0
    %v119 = vadd.f32 %v47, %v118
    %v120 = vpop.f32.mrb[0].mxu0
    %121 = vdwg.mxu0
    %v122 = vxor.u32 %v119, 2147483648
    %v123 = vmul.f32 %v122, 1.442695
    %v124 = vpow.pop %v123
    %v125 = vadd.f32 %v124, 1.0
    %v126 = vrcp.pop %v125
    %v127 = vmul.f32 1.0, %v126
    %v128 = vtanh.pop %v119
    %130 = vrot.lane.b32.xlu0 %v128, 112
    %v131 = vpop.permute.xlu0 %130
    %v133 = vmul.f32 %v127, %v131
    %v134 = vtanh.pop %v133
    %136 = vrot.lane.b32.xlu0 %v134, 32
    %v137 = vpop.permute.xlu0 %136
    %v139 = vmul.f32 %v127, %v137
    %s140 = scalar_lea.vmem [#allocation5], 40
    %v141 = vld [vmem:[%s140] sm:$0xff]
    %v142 = vld [vmem:[%s140 + $0x8] sm:$0xff]
    %v143 = vld [vmem:[%s140 + $0x20] sm:$0xff]
    %v144 = vlaneseq
    %v145 = vshrl.u32 %v144, 7
    %v146 = vsub.s32 0, %v145
    %v147 = vrot.slane %v143, %v146
    %149 = vrot.lane.b32.xlu0 %v139, 96
    %v150 = vpop.permute.xlu0 %149
    %v151 = vsel %vm48, %v150, 0
    %153 = vmatprep.subr.mxu0 0.0
    %154 = vmatpush1.msra.mxu0 %v141
    %155 = vmatprep.subr.mxu0 0.0
    %156 = vmatpush1.msra.mxu0 %v142
    %157 = vmatprep.subr.mxu0 0.0
    %158 = vmatpush1.msra.mxu0 0.0
    %159 = vmatprep.subr.mxu0 0.0
    %160 = vmatpush1.msra.mxu0 0.0
    %161 = vmatprep.subr.mxu0 0.0
    %162 = vmatpush1.msra.mxu0 0.0
    %163 = vmatprep.subr.mxu0 0.0
    %164 = vmatpush1.msra.mxu0 0.0
    %165 = vmatprep.subr.mxu0 0.0
    %166 = vmatpush1.msra.mxu0 0.0
    %167 = vmatprep.subr.mxu0 0.0
    %168 = vmatpush1.msra.mxu0 0.0
    %169 = vmatprep.subr.mxu0 0.0
    %170 = vmatpush1.msra.mxu0 0.0
    %171 = vmatprep.subr.mxu0 0.0
    %172 = vmatpush1.msra.mxu0 0.0
    %173 = vmatprep.subr.mxu0 0.0
    %174 = vmatpush1.msra.mxu0 0.0
    %175 = vmatprep.subr.mxu0 0.0
    %176 = vmatpush1.msra.mxu0 0.0
    %177 = vmatprep.subr.mxu0 0.0
    %178 = vmatpush1.msra.mxu0 0.0
    %179 = vmatprep.subr.mxu0 0.0
    %180 = vmatpush1.msra.mxu0 0.0
    %181 = vmatprep.subr.mxu0 0.0
    %182 = vmatpush1.msra.mxu0 0.0
    %183 = vmatprep.subr.mxu0 0.0
    %184 = vmatpush1.msra.mxu0 0.0
    %185 = vmatprep.subr.mxu0 0.0
    %186 = vmatpush1.msra.mxu0 0.0
    %187 = vmatprep.subr.mxu0 0.0
    %188 = vmatpush1.msra.mxu0 0.0
    %189 = vmatprep.subr.mxu0 0.0
    %190 = vmatpush1.msra.mxu0 0.0
    %191 = vmatprep.subr.mxu0 0.0
    %192 = vmatpush1.msra.mxu0 0.0
    %193 = vmatprep.subr.mxu0 0.0
    %194 = vmatpush1.msra.mxu0 0.0
    %195 = vmatprep.subr.mxu0 0.0
    %196 = vmatpush1.msra.mxu0 0.0
    %197 = vmatprep.subr.mxu0 0.0
    %198 = vmatpush1.msra.mxu0 0.0
    %199 = vmatprep.subr.mxu0 0.0
    %200 = vmatpush1.msra.mxu0 0.0
    %201 = vmatprep.subr.mxu0 0.0
    %202 = vmatpush1.msra.mxu0 0.0
    %203 = vmatprep.subr.mxu0 0.0
    %204 = vmatpush1.msra.mxu0 0.0
    %205 = vmatprep.subr.mxu0 0.0
    %206 = vmatpush1.msra.mxu0 0.0
    %207 = vmatprep.subr.mxu0 0.0
    %208 = vmatpush1.msra.mxu0 0.0
    %209 = vmatprep.subr.mxu0 0.0
    %210 = vmatpush1.msra.mxu0 0.0
    %211 = vmatprep.subr.mxu0 0.0
    %212 = vmatpush1.msra.mxu0 0.0
    %213 = vmatprep.subr.mxu0 0.0
    %214 = vmatpush1.msra.mxu0 0.0
    %215 = vmatprep.subr.mxu0 0.0
    %216 = vmatpush1.msra.mxu0 0.0
    %217 = vmatprep.mubr.f32.mxu0 0.0
    %218 = vmatmul.mubr.f32.gmra.mrb[0].mxu0 %v151
    %v219 = vpop.f32.mrb[0].mxu0
    %v220 = vadd.f32 %v147, %v219
    %v221 = vpop.f32.mrb[0].mxu0
    %222 = vdwg.mxu0
    %v223 = vxor.u32 %v220, 2147483648
    %v224 = vmul.f32 %v223, 1.442695
    %v225 = vpow.pop %v224
    %v226 = vadd.f32 %v225, 1.0
    %v227 = vrcp.pop %v226
    %v228 = vmul.f32 1.0, %v227
    %v229 = vtanh.pop %v220
    %231 = vrot.lane.b32.xlu0 %v229, 112
    %v232 = vpop.permute.xlu0 %231
    %v234 = vmul.f32 %v228, %v232
    %v235 = vtanh.pop %v234
    %237 = vrot.lane.b32.xlu0 %v235, 32
    %v238 = vpop.permute.xlu0 %237
    %v240 = vmul.f32 %v228, %v238
    %s241 = scalar_lea.vmem [#allocation5], 80
    %v242 = vld [vmem:[%s241] sm:$0xff]
    %v243 = vld [vmem:[%s241 + $0x8] sm:$0xff]
    %v244 = vld [vmem:[%s241 + $0x20] sm:$0xff]
    %v245 = vlaneseq
    %v246 = vshrl.u32 %v245, 7
    %v247 = vsub.s32 0, %v246
    %v248 = vrot.slane %v244, %v247
    %250 = vrot.lane.b32.xlu0 %v240, 96
    %v251 = vpop.permute.xlu0 %250
    %v252 = vsel %vm48, %v251, 0
    %254 = vmatprep.subr.mxu0 0.0
    %255 = vmatpush1.msra.mxu0 %v242
    %256 = vmatprep.subr.mxu0 0.0
    %257 = vmatpush1.msra.mxu0 %v243
    %258 = vmatprep.subr.mxu0 0.0
    %259 = vmatpush1.msra.mxu0 0.0
    %260 = vmatprep.subr.mxu0 0.0
    %261 = vmatpush1.msra.mxu0 0.0
    %262 = vmatprep.subr.mxu0 0.0
    %263 = vmatpush1.msra.mxu0 0.0
    %264 = vmatprep.subr.mxu0 0.0
    %265 = vmatpush1.msra.mxu0 0.0
    %266 = vmatprep.subr.mxu0 0.0
    %267 = vmatpush1.msra.mxu0 0.0
    %268 = vmatprep.subr.mxu0 0.0
    %269 = vmatpush1.msra.mxu0 0.0
    %270 = vmatprep.subr.mxu0 0.0
    %271 = vmatpush1.msra.mxu0 0.0
    %272 = vmatprep.subr.mxu0 0.0
    %273 = vmatpush1.msra.mxu0 0.0
    %274 = vmatprep.subr.mxu0 0.0
    %275 = vmatpush1.msra.mxu0 0.0
    %276 = vmatprep.subr.mxu0 0.0
    %277 = vmatpush1.msra.mxu0 0.0
    %278 = vmatprep.subr.mxu0 0.0
    %279 = vmatpush1.msra.mxu0 0.0
    %280 = vmatprep.subr.mxu0 0.0
    %281 = vmatpush1.msra.mxu0 0.0
    %282 = vmatprep.subr.mxu0 0.0
    %283 = vmatpush1.msra.mxu0 0.0
    %284 = vmatprep.subr.mxu0 0.0
    %285 = vmatpush1.msra.mxu0 0.0
    %286 = vmatprep.subr.mxu0 0.0
    %287 = vmatpush1.msra.mxu0 0.0
    %288 = vmatprep.subr.mxu0 0.0
    %289 = vmatpush1.msra.mxu0 0.0
    %290 = vmatprep.subr.mxu0 0.0
    %291 = vmatpush1.msra.mxu0 0.0
    %292 = vmatprep.subr.mxu0 0.0
    %293 = vmatpush1.msra.mxu0 0.0
    %294 = vmatprep.subr.mxu0 0.0
    %295 = vmatpush1.msra.mxu0 0.0
    %296 = vmatprep.subr.mxu0 0.0
    %297 = vmatpush1.msra.mxu0 0.0
    %298 = vmatprep.subr.mxu0 0.0
    %299 = vmatpush1.msra.mxu0 0.0
    %300 = vmatprep.subr.mxu0 0.0
    %301 = vmatpush1.msra.mxu0 0.0
    %302 = vmatprep.subr.mxu0 0.0
    %303 = vmatpush1.msra.mxu0 0.0
    %304 = vmatprep.subr.mxu0 0.0
    %305 = vmatpush1.msra.mxu0 0.0
    %306 = vmatprep.subr.mxu0 0.0
    %307 = vmatpush1.msra.mxu0 0.0
    %308 = vmatprep.subr.mxu0 0.0
    %309 = vmatpush1.msra.mxu0 0.0
    %310 = vmatprep.subr.mxu0 0.0
    %311 = vmatpush1.msra.mxu0 0.0
    %312 = vmatprep.subr.mxu0 0.0
    %313 = vmatpush1.msra.mxu0 0.0
    %314 = vmatprep.subr.mxu0 0.0
    %315 = vmatpush1.msra.mxu0 0.0
    %316 = vmatprep.subr.mxu0 0.0
    %317 = vmatpush1.msra.mxu0 0.0
    %318 = vmatprep.mubr.f32.mxu0 0.0
    %319 = vmatmul.mubr.f32.gmra.mrb[0].mxu0 %v252
    %v320 = vpop.f32.mrb[0].mxu0
    %v321 = vadd.f32 %v248, %v320
    %v322 = vpop.f32.mrb[0].mxu0
    %323 = vdwg.mxu0
    %v324 = vxor.u32 %v321, 2147483648
    %v325 = vmul.f32 %v324, 1.442695
    %v326 = vpow.pop %v325
    %v327 = vadd.f32 %v326, 1.0
    %v328 = vrcp.pop %v327
    %v329 = vmul.f32 1.0, %v328
    %v330 = vtanh.pop %v321
    %332 = vrot.lane.b32.xlu0 %v330, 96
    %v333 = vpop.permute.xlu0 %332
    %v335 = vmul.f32 %v329, %v333
    %v336 = vtanh.pop %v335
    %338 = vrot.lane.b32.xlu0 %v336, 64
    %v339 = vpop.permute.xlu0 %338
    %v341 = vmul.f32 %v329, %v339
    %s342 = scalar_lea.vmem [#allocation5], 120
    %v343 = vld [vmem:[%s342] sm:$0xff]
    %v344 = vld [vmem:[%s342 + $0x8] sm:$0xff]
    %v345 = vld [vmem:[%s342 + $0x10] sm:$0xff]
    %v346 = vld [vmem:[%s342 + $0x18] sm:$0xff]
    %v347 = vld [vmem:[%s342 + $0x20] sm:$0xff]
    %v348 = vlaneseq
    %v349 = vshrl.u32 %v348, 7
    %v350 = vsub.s32 0, %v349
    %v351 = vrot.slane %v347, %v350
    %353 = vrot.lane.b32.xlu0 %v341, 64
    %v354 = vpop.permute.xlu0 %353
    %vm355 = vcmask 261120
    %v356 = vsel %vm355, %v354, 0
    %358 = vmatprep.subr.mxu0 0.0
    %359 = vmatpush1.msra.mxu0 %v343
    %360 = vmatprep.subr.mxu0 0.0
    %361 = vmatpush1.msra.mxu0 %v344
    %362 = vmatprep.subr.mxu0 0.0
    %363 = vmatpush1.msra.mxu0 %v345
    %364 = vmatprep.subr.mxu0 0.0
    %365 = vmatpush1.msra.mxu0 %v346
    %366 = vmatprep.subr.mxu0 0.0
    %367 = vmatpush1.msra.mxu0 0.0
    %368 = vmatprep.subr.mxu0 0.0
    %369 = vmatpush1.msra.mxu0 0.0
    %370 = vmatprep.subr.mxu0 0.0
    %371 = vmatpush1.msra.mxu0 0.0
    %372 = vmatprep.subr.mxu0 0.0
    %373 = vmatpush1.msra.mxu0 0.0
    %374 = vmatprep.subr.mxu0 0.0
    %375 = vmatpush1.msra.mxu0 0.0
    %376 = vmatprep.subr.mxu0 0.0
    %377 = vmatpush1.msra.mxu0 0.0
    %378 = vmatprep.subr.mxu0 0.0
    %379 = vmatpush1.msra.mxu0 0.0
    %380 = vmatprep.subr.mxu0 0.0
    %381 = vmatpush1.msra.mxu0 0.0
    %382 = vmatprep.subr.mxu0 0.0
    %383 = vmatpush1.msra.mxu0 0.0
    %384 = vmatprep.subr.mxu0 0.0
    %385 = vmatpush1.msra.mxu0 0.0
    %386 = vmatprep.subr.mxu0 0.0
    %387 = vmatpush1.msra.mxu0 0.0
    %388 = vmatprep.subr.mxu0 0.0
    %389 = vmatpush1.msra.mxu0 0.0
    %390 = vmatprep.subr.mxu0 0.0
    %391 = vmatpush1.msra.mxu0 0.0
    %392 = vmatprep.subr.mxu0 0.0
    %393 = vmatpush1.msra.mxu0 0.0
    %394 = vmatprep.subr.mxu0 0.0
    %395 = vmatpush1.msra.mxu0 0.0
    %396 = vmatprep.subr.mxu0 0.0
    %397 = vmatpush1.msra.mxu0 0.0
    %398 = vmatprep.subr.mxu0 0.0
    %399 = vmatpush1.msra.mxu0 0.0
    %400 = vmatprep.subr.mxu0 0.0
    %401 = vmatpush1.msra.mxu0 0.0
    %402 = vmatprep.subr.mxu0 0.0
    %403 = vmatpush1.msra.mxu0 0.0
    %404 = vmatprep.subr.mxu0 0.0
    %405 = vmatpush1.msra.mxu0 0.0
    %406 = vmatprep.subr.mxu0 0.0
    %407 = vmatpush1.msra.mxu0 0.0
    %408 = vmatprep.subr.mxu0 0.0
    %409 = vmatpush1.msra.mxu0 0.0
    %410 = vmatprep.subr.mxu0 0.0
    %411 = vmatpush1.msra.mxu0 0.0
    %412 = vmatprep.subr.mxu0 0.0
    %413 = vmatpush1.msra.mxu0 0.0
    %414 = vmatprep.subr.mxu0 0.0
    %415 = vmatpush1.msra.mxu0 0.0
    %416 = vmatprep.subr.mxu0 0.0
    %417 = vmatpush1.msra.mxu0 0.0
    %418 = vmatprep.subr.mxu0 0.0
    %419 = vmatpush1.msra.mxu0 0.0
    %420 = vmatprep.subr.mxu0 0.0
    %421 = vmatpush1.msra.mxu0 0.0
    %422 = vmatprep.mubr.f32.mxu0 0.0
    %423 = vmatmul.mubr.f32.gmra.mrb[0].mxu0 %v356
    %v424 = vpop.f32.mrb[0].mxu0
    %v425 = vadd.f32 %v351, %v424
    %v426 = vpop.f32.mrb[0].mxu0
    %427 = vdwg.mxu0
    %v428 = vxor.u32 %v425, 2147483648
    %v429 = vmul.f32 %v428, 1.442695
    %v430 = vpow.pop %v429
    %v431 = vadd.f32 %v430, 1.0
    %v432 = vrcp.pop %v431
    %v433 = vmul.f32 1.0, %v432
    %v434 = vtanh.pop %v425
    %436 = vrot.lane.b32.xlu0 %v434, 96
    %v437 = vpop.permute.xlu0 %436
    %v439 = vmul.f32 %v433, %v437
    %v440 = vtanh.pop %v439
    %442 = vrot.lane.b32.xlu0 %v440, 64
    %v443 = vpop.permute.xlu0 %442
    %v445 = vmul.f32 %v433, %v443
    %s446 = scalar_lea.vmem [#allocation5], 160
    %v447 = vld [vmem:[%s446] sm:$0xff]
    %v448 = vld [vmem:[%s446 + $0x8] sm:$0xff]
    %v449 = vld [vmem:[%s446 + $0x10] sm:$0xff]
    %v450 = vld [vmem:[%s446 + $0x18] sm:$0xff]
    %v451 = vld [vmem:[%s446 + $0x20] sm:$0xff]
    %v452 = vlaneseq
    %v453 = vshrl.u32 %v452, 7
    %v454 = vsub.s32 0, %v453
    %v455 = vrot.slane %v451, %v454
    %457 = vrot.lane.b32.xlu0 %v445, 64
    %v458 = vpop.permute.xlu0 %457
    %v459 = vsel %vm355, %v458, 0
    %461 = vmatprep.subr.mxu0 0.0
    %462 = vmatpush1.msra.mxu0 %v447
    %463 = vmatprep.subr.mxu0 0.0
    %464 = vmatpush1.msra.mxu0 %v448
    %465 = vmatprep.subr.mxu0 0.0
    %466 = vmatpush1.msra.mxu0 %v449
    %467 = vmatprep.subr.mxu0 0.0
    %468 = vmatpush1.msra.mxu0 %v450
    %469 = vmatprep.subr.mxu0 0.0
    %470 = vmatpush1.msra.mxu0 0.0
    %471 = vmatprep.subr.mxu0 0.0
    %472 = vmatpush1.msra.mxu0 0.0
    %473 = vmatprep.subr.mxu0 0.0
    %474 = vmatpush1.msra.mxu0 0.0
    %475 = vmatprep.subr.mxu0 0.0
    %476 = vmatpush1.msra.mxu0 0.0
    %477 = vmatprep.subr.mxu0 0.0
    %478 = vmatpush1.msra.mxu0 0.0
    %479 = vmatprep.subr.mxu0 0.0
    %480 = vmatpush1.msra.mxu0 0.0
    %481 = vmatprep.subr.mxu0 0.0
    %482 = vmatpush1.msra.mxu0 0.0
    %483 = vmatprep.subr.mxu0 0.0
    %484 = vmatpush1.msra.mxu0 0.0
    %485 = vmatprep.subr.mxu0 0.0
    %486 = vmatpush1.msra.mxu0 0.0
    %487 = vmatprep.subr.mxu0 0.0
    %488 = vmatpush1.msra.mxu0 0.0
    %489 = vmatprep.subr.mxu0 0.0
    %490 = vmatpush1.msra.mxu0 0.0
    %491 = vmatprep.subr.mxu0 0.0
    %492 = vmatpush1.msra.mxu0 0.0
    %493 = vmatprep.subr.mxu0 0.0
    %494 = vmatpush1.msra.mxu0 0.0
    %495 = vmatprep.subr.mxu0 0.0
    %496 = vmatpush1.msra.mxu0 0.0
    %497 = vmatprep.subr.mxu0 0.0
    %498 = vmatpush1.msra.mxu0 0.0
    %499 = vmatprep.subr.mxu0 0.0
    %500 = vmatpush1.msra.mxu0 0.0
    %501 = vmatprep.subr.mxu0 0.0
    %502 = vmatpush1.msra.mxu0 0.0
    %503 = vmatprep.subr.mxu0 0.0
    %504 = vmatpush1.msra.mxu0 0.0
    %505 = vmatprep.subr.mxu0 0.0
    %506 = vmatpush1.msra.mxu0 0.0
    %507 = vmatprep.subr.mxu0 0.0
    %508 = vmatpush1.msra.mxu0 0.0
    %509 = vmatprep.subr.mxu0 0.0
    %510 = vmatpush1.msra.mxu0 0.0
    %511 = vmatprep.subr.mxu0 0.0
    %512 = vmatpush1.msra.mxu0 0.0
    %513 = vmatprep.subr.mxu0 0.0
    %514 = vmatpush1.msra.mxu0 0.0
    %515 = vmatprep.subr.mxu0 0.0
    %516 = vmatpush1.msra.mxu0 0.0
    %517 = vmatprep.subr.mxu0 0.0
    %518 = vmatpush1.msra.mxu0 0.0
    %519 = vmatprep.subr.mxu0 0.0
    %520 = vmatpush1.msra.mxu0 0.0
    %521 = vmatprep.subr.mxu0 0.0
    %522 = vmatpush1.msra.mxu0 0.0
    %523 = vmatprep.subr.mxu0 0.0
    %524 = vmatpush1.msra.mxu0 0.0
    %525 = vmatprep.mubr.f32.mxu0 0.0
    %526 = vmatmul.mubr.f32.gmra.mrb[0].mxu0 %v459
    %v527 = vpop.f32.mrb[0].mxu0
    %v528 = vadd.f32 %v455, %v527
    %v529 = vpop.f32.mrb[0].mxu0
    %530 = vdwg.mxu0
    %vm531 = vcmask 123904
    %532 = vst.msk [vmem:[#allocation7] sm:$0x3] %vm531, %v528
    // Predicated region
    $region18: #{tpu_custom_call.1} parent=1 // pred_check
      _
    $region19: #{tpu_custom_call.1} parent=1 // pred_check_branch
      %534 = sbr.rel (0) target = $region21
    $region20: #{tpu_custom_call.1} parent=1 // pred_region
      %s536 = ssub.s32 32, 32
      %537 = vsyncadd [#allocation4], %s536
      %s539 = sshll.u32 [#allocation7], 4
      %s540 = int_to_ptr.vmem [resolvable:$true] %s539
      %542 = dma.vmem_to_hbm [thread:$0]  %s540, 32, %s2, [#allocation4]
    $region21: #{tpu_custom_call.1} parent=1 // pred_fallthru
      _
    // Predicated region
    $region22: #{tpu_custom_call.1} parent=1 // pred_check
      _
    $region23: #{tpu_custom_call.1} parent=1 // pred_check_branch
      %544 = sbr.rel (0) target = $region25
    $region24: #{tpu_custom_call.1} parent=1 // pred_region
      %545 = dma.done [#allocation4], 32
    $region25: #{tpu_custom_call.1} parent=1 // pred_fallthru
      _
    %546 = vsyncpa [#allocation3], 1
    %547 = vsyncpa [#allocation6], 1
    %548 = vsyncpa [#allocation4], 1

</llo_original>
